<compile_context>
chip_gen: v7x
topology: tpu7x:2x2x1
jax: 0.10.0
libtpu: 0.0.40
codegen_flags: <defaults>
</compile_context>

<pallas_src>
import functools

import numpy as np
import jax
import jax.numpy as jnp
from jax.experimental import pallas as pl
from jax.experimental.pallas import tpu as pltpu


# --------------------------------------------------------------------------- #
# Kernel (identity template — a concrete Agent subclass would add compute here)
# --------------------------------------------------------------------------- #
def _agent_state_identity_kernel(state_ref, out_ref):
    out_ref[...] = state_ref[...]


# --------------------------------------------------------------------------- #
# Tiling helpers
# --------------------------------------------------------------------------- #
def _scoped_vmem_limit_bytes() -> int:
    """Scoped VMEM limit: <=32 MiB, and never more than half the physical VMEM
    (v7x only has 64 MiB physical vs 128 MiB on v5e/v6e)."""
    try:
        physical = pltpu.get_tpu_info().vmem_capacity_bytes
    except Exception:  # pragma: no cover - conservative fallback
        physical = 64 * 1024 * 1024
    return min(32 * 1024 * 1024, physical // 2)


def _pick_batch_tile(batch: int, row_bytes: int, target_tile_bytes: int) -> int:
    """Largest multiple-of-8 batch tile whose bytes stay under the target.
    Full batch if it already fits (block == full array is always legal)."""
    if batch * row_bytes <= target_tile_bytes:
        return batch
    rows = (target_tile_bytes // max(row_bytes, 1)) // 8 * 8
    rows = max(rows, 8)
    return min(rows, batch)


# --------------------------------------------------------------------------- #
# Pallas template path (jit-donated so Pallas aliasing is honored by XLA)
# --------------------------------------------------------------------------- #
@functools.partial(jax.jit, donate_argnums=(0,), static_argnames=("target_tile_bytes",))
def _state_identity_copy(state: jax.Array, *, target_tile_bytes=None) -> jax.Array:
    batch, state_dim = state.shape
    vmem_limit = _scoped_vmem_limit_bytes()
    if target_tile_bytes is None:
        # in + out, double-buffered (4 live tiles) plus headroom -> limit / 8
        target_tile_bytes = vmem_limit // 8  # ~4 MiB under the 32 MiB scoped limit

    row_bytes = state_dim * state.dtype.itemsize
    tile_b = _pick_batch_tile(batch, row_bytes, target_tile_bytes)
    grid = (pl.cdiv(batch, tile_b),)  # partial last block handled by Pallas

    return pl.pallas_call(
        _agent_state_identity_kernel,
        out_shape=jax.ShapeDtypeStruct((batch, state_dim), state.dtype),
        grid_spec=pl.GridSpec(
            grid=grid,
            in_specs=[pl.BlockSpec((tile_b, state_dim), lambda i: (i, 0))],
            out_specs=pl.BlockSpec((tile_b, state_dim), lambda i: (i, 0)),
        ),
        # Output reuses the (donated) input HBM buffer: no new allocation.
        input_output_aliases={0: 0},
        compiler_params=pltpu.CompilerParams(
            # Single tiled-batch axis; "parallel" lets v7x's 2 TensorCores each
            # drive half the (memory-bound) copy. Neutral on v5e/v6e.
            dimension_semantics=("parallel",),
            vmem_limit_bytes=vmem_limit,
        ),
    )(state)


# --------------------------------------------------------------------------- #
# Public wrappers
# --------------------------------------------------------------------------- #
def agent_forward(state: jax.Array, action: jax.Array):
    """Abstract Agent.forward: no parameters, no computation.

    The dominant optimization (per review) is to skip the kernel entirely —
    returning the inputs is 0 bytes of HBM traffic and 0 launch overhead.
    """
    return state, action


def agent_forward_pallas(state: jax.Array, action: jax.Array, *, target_tile_bytes=None):
    """Kernel-template path for concrete Agent subclasses.

    Streams `state` through a tiled, double-buffered, input-aliased Pallas
    copy; the tiny lane-sparse `action` array bypasses the per-step DMA path
    and is passed through by the wrapper (free).

    NOTE: `state` is donated — callers must not reuse it after this call.
    """
    assert state.shape[0] == action.shape[0], "state/action must share the batch dim"
    state_out = _state_identity_copy(state, target_tile_bytes=target_tile_bytes)
    return state_out, action


# --------------------------------------------------------------------------- #
# Self-test
# --------------------------------------------------------------------------- #
if __name__ == "__main__":
    key = jax.random.PRNGKey(0)
    k_state, k_action, k_state2 = jax.random.split(key, 3)

    # --- Small shapes consistent with the module (bandit state/action). ---
    batch, state_dim, action_dim = 2, 32, 4
    state = jax.random.normal(k_state, (batch, state_dim), dtype=jnp.float32)
    action = jax.random.normal(k_action, (batch, action_dim), dtype=jnp.float32)

    # 1) Default abstract-Agent path: zero-cost pass-through.
    s0, a0 = agent_forward(state, action)
    jax.block_until_ready((s0, a0))
    assert s0 is state and a0 is action

    # 2) Pallas template path. `state` is donated, so snapshot host copies first.
    state_host = np.asarray(jax.device_get(state))
    action_host = np.asarray(jax.device_get(action))
    s1, a1 = agent_forward_pallas(state, action)
    jax.block_until_ready((s1, a1))
    assert s1.shape == state_host.shape and a1.shape == action_host.shape
    np.testing.assert_allclose(np.asarray(s1), state_host)
    np.testing.assert_allclose(np.asarray(a1), action_host)

    # 3) Larger, non-multiple-of-8 batch with a small tile target: exercises the
    #    cdiv-tiled, partial-last-block pipelined path.
    big_batch, big_state_dim = 1000, 256
    state_big = jax.random.normal(k_state2, (big_batch, big_state_dim), dtype=jnp.float32)
    action_big = jnp.zeros((big_batch, action_dim), dtype=jnp.float32)
    state_big_host = np.asarray(jax.device_get(state_big))
    s2, a2 = agent_forward_pallas(state_big, action_big, target_tile_bytes=64 * 1024)
    jax.block_until_ready((s2, a2))
    np.testing.assert_allclose(np.asarray(s2), state_big_host)
    np.testing.assert_allclose(np.asarray(a2), np.asarray(jax.device_get(action_big)))

    print("KERNEL_OK")
</pallas_src>

<mosaic_0001>
module attributes {stable_mosaic.version = 11 : i64} {
  func.func @_agent_state_identity_kernel(%arg0: i32, %arg1: memref<2x32xf32, #tpu.memory_space<vmem>>, %arg2: memref<2x32xf32, #tpu.memory_space<vmem>>) attributes {dimension_semantics = [#tpu.dimension_semantics<parallel>], iteration_bounds = array<i64: 1>, scalar_prefetch = 0 : i64, scratch_operands = 0 : i64, tpu.core_type = #tpu.core_type<tc>, window_params = [{transform_indices = @transform_0, window_bounds = array<i64: 2, 32>}, {transform_indices = @transform_1, window_bounds = array<i64: 2, 32>}]} {
    %c0 = arith.constant 0 : index
    %c0_0 = arith.constant 0 : index
    %0 = vector.load %arg1[%c0, %c0_0] : memref<2x32xf32, #tpu.memory_space<vmem>>, vector<2x32xf32>
    %c0_1 = arith.constant 0 : index
    %c0_2 = arith.constant 0 : index
    %1 = vector.load %arg2[%c0_1, %c0_2] : memref<2x32xf32, #tpu.memory_space<vmem>>, vector<2x32xf32>
    tpu.vector_store %arg2[%c0_1, %c0_2], %0 {strides = array<i32>} : memref<2x32xf32, #tpu.memory_space<vmem>>, vector<2x32xf32>,
    return
  }
  func.func @transform_0(%arg0: i32) -> (i32, i32) {
    %c0_i32 = arith.constant 0 : i32
    %c0_i32_0 = arith.constant 0 : i32
    return %arg0, %c0_i32 : i32, i32
  }
  func.func @transform_1(%arg0: i32) -> (i32, i32) {
    %c0_i32 = arith.constant 0 : i32
    %c0_i32_0 = arith.constant 0 : i32
    return %arg0, %c0_i32 : i32, i32
  }
}

</mosaic_0001>

<llo_original>
// kernel: _state_identity_copy.1
$region0: #{_state_identity_copy.1}
  #allocation0 [shape = 'u32[]', space=smem, size = 0x4, offset = 0x4, fixed_abs, tag = 'smem constant byte address 0x4 - core index']
  #allocation1 [shape = 'u32[144,128]{1,0:T(1,128)}', space=vmem, size = 0x12000, scoped, tag = 'internal scratch']
  %s0 = inlined_call_operand.hbm [shape: f32[2,32], index: 0, kind: input, shape index: {}, may-alias: {0,1}]
  %s1 = inlined_call_operand.hbm [shape: f32[2,32], index: 1, kind: output, shape index: {}, may-alias: {0,1}]
  %s2 = sld [smem:[#allocation0]]
  $region18: #{_state_identity_copy.1} parent=0
    _
  %s4 = ssub.s32 1, %s2
  %s5 = scalar_select 0, %s4, %s2
  $region1: #{_state_identity_copy.1} parent=0
    #allocation2 [shape = 'u8[1024]{0}', space=vmem, size = 0x400, scoped, tag = 'input window, operand 0, single buffered']
    #allocation3 [shape = 's32[1]{0}', space=sflag, size = 0x4, scoped, tag = 'scoped memory for _state_identity_copy.1']
    #allocation4 [shape = 's32[1]{0}', space=sflag, size = 0x4, scoped, tag = 'scoped memory for _state_identity_copy.1']
    #allocation5 [shape = 'u8[1024]{0}', space=vmem, size = 0x400, scoped, tag = 'output window, operand 0, single buffered']
    %6 = vsyncpa [#allocation3], 0
    %7 = vsyncpa [#allocation4], 0
    // Predicated region
    $region2: #{_state_identity_copy.1} parent=1 // pred_check
      _
    $region3: #{_state_identity_copy.1} parent=1 // pred_check_branch
      %9 = sbr.rel (0) target = $region5
    $region4: #{_state_identity_copy.1} parent=1 // pred_region
      %s11 = ssub.s32 32, 32
      %12 = vsyncadd [#allocation3], %s11
      %s14 = sshll.u32 [#allocation2], 4
      %s15 = int_to_ptr.vmem [resolvable:$true] %s14
      %17 = dma.hbm_to_vmem [thread:$0]  %s0, 32, %s15, [#allocation3]
    $region5: #{_state_identity_copy.1} parent=1 // pred_fallthru
      _
    // Predicated region
    $region6: #{_state_identity_copy.1} parent=1 // pred_check
      _
    $region7: #{_state_identity_copy.1} parent=1 // pred_check_branch
      %19 = sbr.rel (0) target = $region9
    $region8: #{_state_identity_copy.1} parent=1 // pred_region
      %20 = dma.done [#allocation3], 32
    $region9: #{_state_identity_copy.1} parent=1 // pred_fallthru
      _
    %v21 = vld [vmem:[#allocation2] sm:$0x3]
    %vm22 = vcmask 254976
    %23 = vst.msk [vmem:[#allocation5] sm:$0x3] %vm22, %v21
    // Predicated region
    $region10: #{_state_identity_copy.1} parent=1 // pred_check
      _
    $region11: #{_state_identity_copy.1} parent=1 // pred_check_branch
      %25 = sbr.rel (0) target = $region13
    $region12: #{_state_identity_copy.1} parent=1 // pred_region
      %s27 = ssub.s32 32, 32
      %28 = vsyncadd [#allocation4], %s27
      %s30 = sshll.u32 [#allocation5], 4
      %s31 = int_to_ptr.vmem [resolvable:$true] %s30
      %33 = dma.vmem_to_hbm [thread:$0]  %s31, 32, %s1, [#allocation4]
    $region13: #{_state_identity_copy.1} parent=1 // pred_fallthru
      _
    // Predicated region
    $region14: #{_state_identity_copy.1} parent=1 // pred_check
      _
    $region15: #{_state_identity_copy.1} parent=1 // pred_check_branch
      %35 = sbr.rel (0) target = $region17
    $region16: #{_state_identity_copy.1} parent=1 // pred_region
      %36 = dma.done [#allocation4], 32
    $region17: #{_state_identity_copy.1} parent=1 // pred_fallthru
      _
    %37 = vsyncpa [#allocation3], 1
    %38 = vsyncpa [#allocation4], 1

</llo_original>
